<compile_context>
chip_gen: v7x
topology: tpu7x:2x2x1
jax: 0.10.0
libtpu: 0.0.40
codegen_flags: <defaults>
</compile_context>

<pallas_src>
import functools
import math

import jax
import jax.numpy as jnp
from jax import lax
from jax.experimental import pallas as pl
from jax.experimental.pallas import tpu as pltpu


_NEG_LARGE = -1.0e30  # finite mask value: NaN-safe even on never-masked edge cases


# --------------------------------------------------------------------------- #
# Helpers
# --------------------------------------------------------------------------- #
def _physical_vmem_bytes():
    try:
        info = pltpu.get_tpu_info()
        for name in ("vmem_capacity_bytes", "vmem_size_bytes", "vmem_bytes"):
            v = getattr(info, name, None)
            if v:
                return int(v)
    except Exception:
        pass
    return 64 * 1024 * 1024  # conservative default (smallest of v5e/v6e/v7x)


def _fit_tile(dim, target, mults=(16, 8)):
    """Largest tile <= target dividing `dim` that is a multiple of one of `mults`
    (tried in order); falls back to the full dim (always legal as a block)."""
    if dim <= target:
        return dim
    for mult in mults:
        t = (target // mult) * mult
        while t >= mult:
            if dim % t == 0:
                return t
            t -= mult
    return dim


# --------------------------------------------------------------------------- #
# Fused multi-output linear:  (M, K) @ [(K, N0), (K, N1), ...] + biases
# One pass over the activation produces every output (used for fused QKV).
# --------------------------------------------------------------------------- #
def _multi_linear_kernel(*refs, n_out, compute_dtype):
    x_ref = refs[0]
    w_refs = refs[1:1 + n_out]
    b_refs = refs[1 + n_out:1 + 2 * n_out]
    o_refs = refs[1 + 2 * n_out:1 + 3 * n_out]
    acc_refs = refs[1 + 3 * n_out:1 + 4 * n_out]

    kk = pl.program_id(1)

    @pl.when(kk == 0)
    def _():
        for acc in acc_refs:
            acc[...] = jnp.zeros(acc.shape, jnp.float32)

    x = x_ref[...].astype(compute_dtype)
    for w_ref, acc in zip(w_refs, acc_refs):
        acc[...] += jnp.dot(x, w_ref[...], preferred_element_type=jnp.float32)

    @pl.when(kk == pl.num_programs(1) - 1)
    def _():
        for b_ref, o_ref, acc in zip(b_refs, o_refs, acc_refs):
            o_ref[...] = (acc[...] + b_ref[...]).astype(o_ref.dtype)


def pallas_linear(x, weights_t, biases, out_dtype, compute_dtype=jnp.bfloat16):
    """x: (M, K); weights_t: list of (K, Nn) bf16; biases: list of (Nn,) f32.
    Returns a tuple of (M, Nn) arrays with dtype `out_dtype`."""
    M, K = x.shape
    n_out = len(weights_t)
    n_cols = [int(w.shape[1]) for w in weights_t]
    n_total = sum(n_cols)
    phys = _physical_vmem_bytes()

    x_bytes = x.dtype.itemsize
    out_bytes = jnp.dtype(out_dtype).itemsize

    tm = _fit_tile(M, 256, (16, 8))
    tk = _fit_tile(K, 512, (256, 128))

    def est(tm_, tk_):
        return (2 * tm_ * tk_ * x_bytes          # x block (double-buffered)
                + 2 * tk_ * n_total * 2          # weight panels, bf16 (double-buffered)
                + 2 * tm_ * n_total * out_bytes  # output blocks (double-buffered)
                + tm_ * n_total * 4              # f32 accumulators
                + 2 * 8 * n_total * 4)           # biases

    budget = int(0.55 * phys)
    for _ in range(8):
        if est(tm, tk) <= budget:
            break
        new_tk = _fit_tile(K, max(128, tk // 2), (256, 128)) if tk > 128 else tk
        new_tm = tm
        if new_tk == tk and tm > 64:
            new_tm = _fit_tile(M, max(64, tm // 2), (16, 8))
        if new_tk == tk and new_tm == tm:
            break
        tk, tm = new_tk, new_tm

    vmem_limit = int(min(0.9 * phys, max(64 << 20, 2 * est(tm, tk))))

    grid = (M // tm, K // tk)
    in_specs = [pl.BlockSpec((tm, tk), lambda i, k: (i, k))]
    in_specs += [pl.BlockSpec((tk, n), lambda i, k: (k, 0)) for n in n_cols]
    in_specs += [pl.BlockSpec((1, n), lambda i, k: (0, 0)) for n in n_cols]
    out_specs = [pl.BlockSpec((tm, n), lambda i, k: (i, 0)) for n in n_cols]
    out_shape = tuple(jax.ShapeDtypeStruct((M, n), out_dtype) for n in n_cols)
    scratch = [pltpu.VMEM((tm, n), jnp.float32) for n in n_cols]

    outs = pl.pallas_call(
        functools.partial(_multi_linear_kernel, n_out=n_out, compute_dtype=compute_dtype),
        grid_spec=pltpu.PrefetchScalarGridSpec(
            num_scalar_prefetch=0,
            grid=grid,
            in_specs=in_specs,
            out_specs=out_specs,
            scratch_shapes=scratch,
        ),
        out_shape=out_shape,
        compiler_params=pltpu.CompilerParams(
            dimension_semantics=("parallel", "arbitrary"),
            vmem_limit_bytes=vmem_limit,
        ),
    )(x, *weights_t, *[b.reshape(1, -1) for b in biases])
    return outs


# --------------------------------------------------------------------------- #
# Flash attention with per-batch padding mask (all heads per grid step)
# --------------------------------------------------------------------------- #
def _flash_attn_kernel(len_ref, q_ref, k_ref, v_ref, o_ref,
                       m_ref, l_ref, acc_ref, *, num_heads, head_dim):
    H, Dh = num_heads, head_dim
    tq, E = q_ref.shape
    tkv = k_ref.shape[0]

    b = pl.program_id(0)
    qi = pl.program_id(1)
    ki = pl.program_id(2)
    L = len_ref[b]
    q_start = qi * tq
    kv_start = ki * tkv

    @pl.when(ki == 0)
    def _():
        m_ref[...] = jnp.full(m_ref.shape, _NEG_LARGE, jnp.float32)
        l_ref[...] = jnp.zeros(l_ref.shape, jnp.float32)
        acc_ref[...] = jnp.zeros(acc_ref.shape, jnp.float32)

    # Block-sparse skip: only tiles overlapping the valid (<= L) region compute.
    # This also guarantees every processed kv tile has >= 1 valid column, so the
    # online-softmax statistics stay finite.
    @pl.when(jnp.logical_and(kv_start <= L, q_start <= L))
    def _():
        col_valid = (kv_start + lax.broadcasted_iota(jnp.int32, (1, tkv), 1)) <= L

        m_prev = m_ref[...]          # (tq, H) f32
        l_prev = l_ref[...]          # (tq, H) f32

        new_m, new_l, alpha_rep, pv_all = [], [], [], []
        # Static unroll over heads (H is small); all scratch/output stores below
        # are single lane-dense full-width writes (no per-head masked stores).
        for h in range(H):
            lo, hi = h * Dh, (h + 1) * Dh
            qh = q_ref[:, lo:hi]     # (tq, Dh)  bf16, 1/sqrt(Dh) already folded in
            kh = k_ref[:, lo:hi]     # (tkv, Dh) bf16
            vh = v_ref[:, lo:hi]     # (tkv, Dh) bf16

            s = lax.dot_general(qh, kh, (((1,), (1,)), ((), ())),
                                preferred_element_type=jnp.float32)   # (tq, tkv)
            s = jnp.where(col_valid, s, _NEG_LARGE)

            mp = m_prev[:, h:h + 1]
            mn = jnp.maximum(mp, jnp.max(s, axis=-1, keepdims=True))  # (tq, 1)
            a = jnp.exp(mp - mn)                                      # (tq, 1)
            p = jnp.exp(s - mn)                                       # (tq, tkv) f32

            pv = jnp.dot(p.astype(k_ref.dtype), vh,
                         preferred_element_type=jnp.float32)          # (tq, Dh)

            new_m.append(mn)
            new_l.append(a * l_prev[:, h:h + 1] + jnp.sum(p, axis=-1, keepdims=True))
            alpha_rep.append(jnp.broadcast_to(a, (tq, Dh)))
            pv_all.append(pv)

        m_ref[...] = jnp.concatenate(new_m, axis=-1)                  # (tq, H)
        l_ref[...] = jnp.concatenate(new_l, axis=-1)                  # (tq, H)
        acc_ref[...] = (jnp.concatenate(alpha_rep, axis=-1) * acc_ref[...]
                        + jnp.concatenate(pv_all, axis=-1))           # (tq, E)

    @pl.when(ki == pl.num_programs(2) - 1)
    def _():
        row_valid = ((q_start + lax.broadcasted_iota(jnp.int32, (tq, 1), 0)) <= L
                     ).astype(jnp.float32)                            # fully-masked rows -> 0
        l = l_ref[...]
        l = jnp.where(l == 0.0, jnp.float32(1.0), l)                  # never-touched rows
        inv_l = pl.reciprocal(l, approx=True)                         # (tq, H), EUP slot
        inv_rep = jnp.concatenate(
            [jnp.broadcast_to(inv_l[:, h:h + 1], (tq, Dh)) for h in range(H)], axis=-1)
        # one lane-dense full-width store per q tile
        o_ref[...] = (acc_ref[...] * inv_rep * row_valid).astype(o_ref.dtype)


def pallas_flash_attention(q, k, v, lengths, num_heads):
    """q: (B, Sq, E) bf16, k/v: (B, Skv, E) bf16, lengths: (B,) int32 -> (B, Sq, E) bf16."""
    B, Sq, E = q.shape
    Skv = k.shape[1]
    H = num_heads
    Dh = E // H
    phys = _physical_vmem_bytes()

    def est_bytes(tq_, tkv_):
        blocks = (2 * tq_ * E * 2          # q block, bf16, double-buffered
                  + 2 * 2 * tkv_ * E * 2   # k and v blocks
                  + 2 * tq_ * E * 2        # out block (bf16)
                  + tq_ * E * 4            # acc scratch (f32)
                  + 2 * tq_ * 128 * 4)     # m/l scratch (lane-padded)
        temps = (2 * H * tq_ * tkv_ * 4    # per-head s/p f32 (static unroll, worst case live)
                 + 4 * tq_ * E * 4)        # concat temporaries
        return blocks + temps

    t = 256
    while t > 128 and est_bytes(min(t, Sq), min(t, Skv)) > int(0.6 * phys):
        t //= 2
    tq = _fit_tile(Sq, t, (16, 8))
    tkv = _fit_tile(Skv, t, (16, 8))
    vmem_limit = int(min(0.9 * phys, max(64 << 20, 2 * est_bytes(tq, tkv))))

    grid = (B, Sq // tq, Skv // tkv)

    def qo_map(b, qi, ki, lens):
        return (b, qi, 0)

    def kv_map(b, qi, ki, lens):
        # Padded KV tiles re-use the previous block index so their HBM->VMEM DMA
        # is skipped entirely (the pl.when gate inside the kernel skips compute).
        return (b, jnp.minimum(ki, lens[b] // tkv), 0)

    kernel = functools.partial(_flash_attn_kernel, num_heads=H, head_dim=Dh)

    return pl.pallas_call(
        kernel,
        grid_spec=pltpu.PrefetchScalarGridSpec(
            num_scalar_prefetch=1,
            grid=grid,
            in_specs=[
                pl.BlockSpec((None, tq, E), qo_map),
                pl.BlockSpec((None, tkv, E), kv_map),
                pl.BlockSpec((None, tkv, E), kv_map),
            ],
            out_specs=pl.BlockSpec((None, tq, E), qo_map),
            scratch_shapes=[
                pltpu.VMEM((tq, H), jnp.float32),   # m (running max), per head
                pltpu.VMEM((tq, H), jnp.float32),   # l (running denom), per head
                pltpu.VMEM((tq, E), jnp.float32),   # acc (lane-dense, all heads)
            ],
        ),
        out_shape=jax.ShapeDtypeStruct((B, Sq, E), jnp.bfloat16),
        compiler_params=pltpu.CompilerParams(
            dimension_semantics=("parallel", "parallel", "arbitrary"),
            vmem_limit_bytes=vmem_limit,
        ),
    )(lengths, q, k, v)


# --------------------------------------------------------------------------- #
# Module equivalent
# --------------------------------------------------------------------------- #
class MultiheadFlexAttentionPallas:
    def __init__(self, embed_dim, num_heads, rng_key, dropout=0.0, bias=True,
                 batch_first=False, compute_dtype=jnp.bfloat16):
        if embed_dim % num_heads != 0:
            raise ValueError("embed_dim must be divisible by num_heads")
        self.embed_dim = embed_dim
        self.num_heads = num_heads
        self.head_dim = embed_dim // num_heads
        self.batch_first = batch_first
        self.compute_dtype = compute_dtype
        # TODO(synk): dropout > 0 not implemented; the original default (p=0.0) is identity.
        self.dropout = dropout

        keys = jax.random.split(rng_key, 8)
        bound = 1.0 / math.sqrt(embed_dim)  # torch Linear default-ish uniform bound

        def u(k_, shape):
            return jax.random.uniform(k_, shape, jnp.float32, minval=-bound, maxval=bound)

        E = embed_dim
        self.wq, self.bq_raw = u(keys[0], (E, E)), u(keys[1], (E,))
        self.wk, self.bk = u(keys[2], (E, E)), u(keys[3], (E,))
        self.wv, self.bv = u(keys[4], (E, E)), u(keys[5], (E,))
        self.wo, self.bo = u(keys[6], (E, E)), u(keys[7], (E,))

        # Pre-transposed, bf16 weights; 1/sqrt(Dh) folded into the Q projection once.
        scale = 1.0 / math.sqrt(self.head_dim)
        self.wq_t = (self.wq.T * scale).astype(jnp.bfloat16)
        self.bq = self.bq_raw * scale
        self.wk_t = self.wk.T.astype(jnp.bfloat16)
        self.wv_t = self.wv.T.astype(jnp.bfloat16)
        self.wo_t = self.wo.T.astype(jnp.bfloat16)

    def __call__(self, query, key, value, query_seq_length=None):
        if self.batch_first:
            query = jnp.swapaxes(query, -3, -2)
            key = jnp.swapaxes(key, -3, -2)
            value = jnp.swapaxes(value, -3, -2)

        S, B, E = query.shape
        Sk = key.shape[0]
        assert E == self.embed_dim
        H = self.num_heads

        if query_seq_length is None:
            lengths = jnp.full((B,), S - 1, dtype=jnp.int32)
        else:
            lengths = query_seq_length.astype(jnp.int32)

        def to_bm(x, s_len):  # (S,B,E) -> lane-dense batch-major (B*S, E)
            return jnp.transpose(x, (1, 0, 2)).reshape(B * s_len, E)

        if (query is key) and (key is value):
            # self-attention: fused QKV projection (one activation read, 3 dense outputs)
            x = to_bm(query, S)
            q2, k2, v2 = pallas_linear(
                x, [self.wq_t, self.wk_t, self.wv_t],
                [self.bq, self.bk, self.bv], jnp.bfloat16, self.compute_dtype)
            Sk = S
        else:
            (q2,) = pallas_linear(to_bm(query, S), [self.wq_t], [self.bq],
                                  jnp.bfloat16, self.compute_dtype)
            (k2,) = pallas_linear(to_bm(key, Sk), [self.wk_t], [self.bk],
                                  jnp.bfloat16, self.compute_dtype)
            (v2,) = pallas_linear(to_bm(value, Sk), [self.wv_t], [self.bv],
                                  jnp.bfloat16, self.compute_dtype)

        q3 = q2.reshape(B, S, E)
        k3 = k2.reshape(B, Sk, E)
        v3 = v2.reshape(B, Sk, E)

        attn = pallas_flash_attention(q3, k3, v3, lengths, H)          # (B, S, E) bf16

        (out,) = pallas_linear(attn.reshape(B * S, E), [self.wo_t], [self.bo],
                               jnp.float32, self.compute_dtype)
        out = jnp.transpose(out.reshape(B, S, E), (1, 0, 2))            # (S, B, E)

        if self.batch_first:
            out = jnp.swapaxes(out, -3, -2)
        return out


# --------------------------------------------------------------------------- #
# Pure-JAX reference (mirrors the kernel's bf16 inputs / f32 accumulation)
# --------------------------------------------------------------------------- #
def _reference(mod, query, key, value, lengths):
    bf = jnp.bfloat16
    S, B, E = query.shape
    Sk = key.shape[0]
    H, Dh = mod.num_heads, mod.head_dim

    def lin(xb, w_t, bias):
        return jnp.einsum("bse,ef->bsf", xb.astype(bf), w_t,
                          preferred_element_type=jnp.float32) + bias

    qb = jnp.transpose(query, (1, 0, 2))
    kb = jnp.transpose(key, (1, 0, 2))
    vb = jnp.transpose(value, (1, 0, 2))

    q = lin(qb, mod.wq_t, mod.bq).astype(bf).reshape(B, S, H, Dh)   # scale folded into wq_t
    k = lin(kb, mod.wk_t, mod.bk).astype(bf).reshape(B, Sk, H, Dh)
    v = lin(vb, mod.wv_t, mod.bv).astype(bf).reshape(B, Sk, H, Dh)

    s = jnp.einsum("bqhd,bkhd->bhqk", q, k, preferred_element_type=jnp.float32)

    qi = jnp.arange(S)[:, None]
    ki = jnp.arange(Sk)[None, :]
    Lb = lengths[:, None, None]
    mask = ((qi <= Lb) & (ki <= Lb))[:, None]             # (B, 1, S, Sk)

    s = jnp.where(mask, s, -jnp.inf)
    m = jnp.max(s, axis=-1, keepdims=True)
    m = jnp.where(jnp.isfinite(m), m, 0.0)
    p = jnp.where(mask, jnp.exp(s - m), 0.0)
    den = jnp.sum(p, axis=-1, keepdims=True)
    den = jnp.where(den == 0.0, 1.0, den)

    o = jnp.einsum("bhqk,bkhd->bhqd", p.astype(bf), v,
                   preferred_element_type=jnp.float32) / den
    o = jnp.transpose(o, (0, 2, 1, 3)).reshape(B, S, E).astype(bf)

    out = jnp.einsum("bse,ef->bsf", o, mod.wo_t,
                     preferred_element_type=jnp.float32) + mod.bo
    return jnp.transpose(out, (1, 0, 2))                  # (S, B, E)


if __name__ == "__main__":
    S, B, E, H = 8, 2, 32, 4
    root = jax.random.PRNGKey(0)
    kq, kk, kv, kp = jax.random.split(root, 4)

    query = jax.random.normal(kq, (S, B, E), jnp.float32)
    key_in = jax.random.normal(kk, (S, B, E), jnp.float32)
    value = jax.random.normal(kv, (S, B, E), jnp.float32)
    lengths = jnp.array([5, 2], dtype=jnp.int32)  # per-batch valid length (inclusive idx)

    mod = MultiheadFlexAttentionPallas(E, H, kp)

    # cross-attention path (three separate projections)
    out = jax.block_until_ready(mod(query, key_in, value, lengths))
    assert out.shape == (S, B, E)
    ref = _reference(mod, query, key_in, value, lengths)
    assert jnp.allclose(out, ref, atol=2e-2, rtol=2e-2), "mismatch vs reference (cross-attn)"

    # self-attention path (fused QKV projection, three dense outputs)
    out_self = jax.block_until_ready(mod(query, query, query, lengths))
    ref_self = _reference(mod, query, query, query, lengths)
    assert jnp.allclose(out_self, ref_self, atol=2e-2, rtol=2e-2), "mismatch vs reference (self-attn)"

    print("KERNEL_OK")
</pallas_src>

<mosaic_0001>
module attributes {stable_mosaic.version = 11 : i64} {
  func.func @_multi_linear_kernel(%arg0: i32, %arg1: i32, %arg2: memref<16x32xf32, #tpu.memory_space<vmem>>, %arg3: memref<32x32xbf16, #tpu.memory_space<vmem>>, %arg4: memref<1x32xf32, #tpu.memory_space<vmem>>, %arg5: memref<16x32xbf16, #tpu.memory_space<vmem>>, %arg6: memref<16x32xf32, #tpu.memory_space<vmem>>) attributes {dimension_semantics = [#tpu.dimension_semantics<parallel>, #tpu.dimension_semantics<arbitrary>], iteration_bounds = array<i64: 1, 1>, scalar_prefetch = 0 : i64, scratch_operands = 1 : i64, tpu.core_type = #tpu.core_type<tc>, window_params = [{transform_indices = @transform_0, window_bounds = array<i64: 16, 32>}, {transform_indices = @transform_1, window_bounds = array<i64: 32, 32>}, {pipeline_mode = #tpu.pipeline_mode<synchronous>, transform_indices = @transform_2, window_bounds = array<i64: 1, 32>}, {transform_indices = @transform_3, window_bounds = array<i64: 16, 32>}]} {
    %c0_i32 = arith.constant 0 : i32
    %0 = arith.cmpi eq, %arg1, %c0_i32 : i32
    %1 = arith.extui %0 : i1 to i32
    %c0_i32_0 = arith.constant 0 : i32
    %2 = arith.cmpi ne, %1, %c0_i32_0 : i32
    scf.if %2 {
      %cst_10 = arith.constant 0.000000e+00 : f32
      %13 = vector.broadcast %cst_10 : f32 to vector<16x32xf32>
      %c0_11 = arith.constant 0 : index
      %c0_12 = arith.constant 0 : index
      %14 = vector.load %arg6[%c0_11, %c0_12] : memref<16x32xf32, #tpu.memory_space<vmem>>, vector<16x32xf32>
      tpu.vector_store %arg6[%c0_11, %c0_12], %13 {strides = array<i32>} : memref<16x32xf32, #tpu.memory_space<vmem>>, vector<16x32xf32>,
    } else {
    }
    %c0 = arith.constant 0 : index
    %c0_1 = arith.constant 0 : index
    %3 = vector.load %arg2[%c0, %c0_1] : memref<16x32xf32, #tpu.memory_space<vmem>>, vector<16x32xf32>
    %4 = arith.truncf %3 : vector<16x32xf32> to vector<16x32xbf16>
    %c0_2 = arith.constant 0 : index
    %c0_3 = arith.constant 0 : index
    %5 = vector.load %arg6[%c0_2, %c0_3] : memref<16x32xf32, #tpu.memory_space<vmem>>, vector<16x32xf32>
    %c0_4 = arith.constant 0 : index
    %c0_5 = arith.constant 0 : index
    %6 = vector.load %arg3[%c0_4, %c0_5] : memref<32x32xbf16, #tpu.memory_space<vmem>>, vector<32x32xbf16>
    %cst = arith.constant dense<0.000000e+00> : vector<16x32xf32>
    %7 = tpu.matmul %4, %6, %cst {dimension_numbers = #tpu.dot_dimension_numbers<[1], [0], [0], [1], [0, 0, 1, 1], [], []>} : vector<16x32xbf16>, vector<32x32xbf16>, vector<16x32xf32> -> vector<16x32xf32>
    %8 = arith.addf %5, %7 : vector<16x32xf32>
    %c0_6 = arith.constant 0 : index
    %c0_7 = arith.constant 0 : index
    %9 = vector.load %arg6[%c0_6, %c0_7] : memref<16x32xf32, #tpu.memory_space<vmem>>, vector<16x32xf32>
    tpu.vector_store %arg6[%c0_6, %c0_7], %8 {strides = array<i32>} : memref<16x32xf32, #tpu.memory_space<vmem>>, vector<16x32xf32>,
    %c0_i32_8 = arith.constant 0 : i32
    %10 = arith.cmpi eq, %arg1, %c0_i32_8 : i32
    %11 = arith.extui %10 : i1 to i32
    %c0_i32_9 = arith.constant 0 : i32
    %12 = arith.cmpi ne, %11, %c0_i32_9 : i32
    scf.if %12 {
      %c0_10 = arith.constant 0 : index
      %c0_11 = arith.constant 0 : index
      %13 = vector.load %arg6[%c0_10, %c0_11] : memref<16x32xf32, #tpu.memory_space<vmem>>, vector<16x32xf32>
      %c0_12 = arith.constant 0 : index
      %c0_13 = arith.constant 0 : index
      %14 = vector.load %arg4[%c0_12, %c0_13] : memref<1x32xf32, #tpu.memory_space<vmem>>, vector<1x32xf32>
      %15 = vector.broadcast %14 : vector<1x32xf32> to vector<16x32xf32>
      %16 = arith.addf %13, %15 : vector<16x32xf32>
      %17 = arith.truncf %16 : vector<16x32xf32> to vector<16x32xbf16>
      %c0_14 = arith.constant 0 : index
      %c0_15 = arith.constant 0 : index
      %18 = vector.load %arg5[%c0_14, %c0_15] : memref<16x32xbf16, #tpu.memory_space<vmem>>, vector<16x32xbf16>
      tpu.vector_store %arg5[%c0_14, %c0_15], %17 {strides = array<i32>} : memref<16x32xbf16, #tpu.memory_space<vmem>>, vector<16x32xbf16>,
    } else {
    }
    return
  }
  func.func @transform_0(%arg0: i32, %arg1: i32) -> (i32, i32) {
    %c0_i32 = arith.constant 0 : i32
    return %arg0, %arg1 : i32, i32
  }
  func.func @transform_1(%arg0: i32, %arg1: i32) -> (i32, i32) {
    %c0_i32 = arith.constant 0 : i32
    %c0_i32_0 = arith.constant 0 : i32
    return %arg1, %c0_i32 : i32, i32
  }
  func.func @transform_2(%arg0: i32, %arg1: i32) -> (i32, i32) {
    %c0_i32 = arith.constant 0 : i32
    %c0_i32_0 = arith.constant 0 : i32
    %c0_i32_1 = arith.constant 0 : i32
    return %c0_i32, %c0_i32_0 : i32, i32
  }
  func.func @transform_3(%arg0: i32, %arg1: i32) -> (i32, i32) {
    %c0_i32 = arith.constant 0 : i32
    %c0_i32_0 = arith.constant 0 : i32
    return %arg0, %c0_i32 : i32, i32
  }
}

</mosaic_0001>

<llo_original>
// kernel: tpu_custom_call.1
$region0: #{tpu_custom_call.1}
  #allocation0 [shape = 'u32[]', space=smem, size = 0x4, offset = 0x4, fixed_abs, tag = 'smem constant byte address 0x4 - core index']
  #allocation1 [shape = 'u32[144,128]{1,0:T(1,128)}', space=vmem, size = 0x12000, scoped, tag = 'internal scratch']
  #allocation2 [shape = 'f32[16,32]{1,0:T(8,128)}', space=vmem, size = 0x2000, scoped, tag = 'scratch operand']
  %s0 = inlined_call_operand.hbm [shape: f32[16,32], index: 0, kind: input, shape index: {}]
  %s1 = inlined_call_operand.hbm [shape: bf16[32,32], index: 1, kind: input, shape index: {}]
  %s2 = inlined_call_operand.vmem [shape: f32[1,32], index: 2, kind: input, shape index: {}]
  %s3 = inlined_call_operand.hbm [shape: bf16[16,32], index: 3, kind: output, shape index: {}]
  %s4 = sld [smem:[#allocation0]]
  $region38: #{tpu_custom_call.1} parent=0
    _
  %s6 = ssub.s32 1, %s4
  %s7 = scalar_select 0, %s6, %s4
  $region1: #{tpu_custom_call.1} parent=0
    #allocation3 [shape = 'u8[8192]{0}', space=vmem, size = 0x2000, scoped, tag = 'input window, operand 0, single buffered']
    #allocation4 [shape = 's32[1]{0}', space=sflag, size = 0x4, scoped, tag = 'scoped memory for tpu_custom_call.1']
    #allocation5 [shape = 's32[1]{0}', space=sflag, size = 0x4, scoped, tag = 'scoped memory for tpu_custom_call.1']
    #allocation6 [shape = 'u8[8192]{0}', space=vmem, size = 0x2000, scoped, tag = 'input window, operand 1, single buffered']
    #allocation7 [shape = 's32[1]{0}', space=sflag, size = 0x4, scoped, tag = 'scoped memory for tpu_custom_call.1']
    #allocation8 [shape = 'u8[4096]{0}', space=vmem, size = 0x1000, scoped, tag = 'output window, operand 0, single buffered']
    %8 = vsyncpa [#allocation4], 0
    %9 = vsyncpa [#allocation7], 0
    %10 = vsyncpa [#allocation5], 0
    // Predicated region
    $region2: #{tpu_custom_call.1} parent=1 // pred_check
      _
    $region3: #{tpu_custom_call.1} parent=1 // pred_check_branch
      %12 = sbr.rel (0) target = $region5
    $region4: #{tpu_custom_call.1} parent=1 // pred_region
      %s14 = ssub.s32 256, 256
      %15 = vsyncadd [#allocation4], %s14
      %s16 = sshll.u32 [#allocation3], 4
      %s17 = int_to_ptr.vmem [resolvable:$true] %s16
      %22 = dma.hbm_to_vmem [thread:$0]  %s0, 256, %s17, [#allocation4], 128, 128, 8
    $region5: #{tpu_custom_call.1} parent=1 // pred_fallthru
      _
    // Predicated region
    $region6: #{tpu_custom_call.1} parent=1 // pred_check
      _
    $region7: #{tpu_custom_call.1} parent=1 // pred_check_branch
      %24 = sbr.rel (0) target = $region9
    $region8: #{tpu_custom_call.1} parent=1 // pred_region
      %s26 = ssub.s32 256, 256
      %27 = vsyncadd [#allocation7], %s26
      %s28 = sshll.u32 [#allocation6], 4
      %s29 = int_to_ptr.vmem [resolvable:$true] %s28
      %34 = dma.hbm_to_vmem [thread:$0]  %s1, 256, %s29, [#allocation7], 64, 64, 4
    $region9: #{tpu_custom_call.1} parent=1 // pred_fallthru
      _
    // Predicated region
    $region10: #{tpu_custom_call.1} parent=1 // pred_check
      _
    $region11: #{tpu_custom_call.1} parent=1 // pred_check_branch
      %36 = sbr.rel (0) target = $region13
    $region12: #{tpu_custom_call.1} parent=1 // pred_region
      _
    $region13: #{tpu_custom_call.1} parent=1 // pred_fallthru
      _
    // Predicated region
    $region14: #{tpu_custom_call.1} parent=1 // pred_check
      _
    $region15: #{tpu_custom_call.1} parent=1 // pred_check_branch
      %38 = sbr.rel (0) target = $region17
    $region16: #{tpu_custom_call.1} parent=1 // pred_region
      %39 = dma.done [#allocation4], 256
    $region17: #{tpu_custom_call.1} parent=1 // pred_fallthru
      _
    // Predicated region
    $region18: #{tpu_custom_call.1} parent=1 // pred_check
      _
    $region19: #{tpu_custom_call.1} parent=1 // pred_check_branch
      %41 = sbr.rel (0) target = $region21
    $region20: #{tpu_custom_call.1} parent=1 // pred_region
      %42 = dma.done [#allocation7], 256
    $region21: #{tpu_custom_call.1} parent=1 // pred_fallthru
      _
    %p44 = scmp.eq.s32.totalorder 0, 0
    // Predicated region
    $region22: #{tpu_custom_call.1} parent=1 // pred_check
      %p45 = pneg %p44
    $region23: #{tpu_custom_call.1} parent=1 // pred_check_branch
      %47 = sbr.rel (%p45) target = $region25
    $region24: #{tpu_custom_call.1} parent=1 // pred_region
      %vm48 = vcmask 261120
      %49 = vst.msk [vmem:[#allocation2] sm:$0xff] %vm48, 0.0
      %50 = vst.msk [vmem:[#allocation2 + $0x8] sm:$0xff] %vm48, 0.0
    $region25: #{tpu_custom_call.1} parent=1 // pred_fallthru
      _
    %v51 = vld [vmem:[#allocation3] sm:$0xff]
    %v52 = vld [vmem:[#allocation3 + $0x8] sm:$0xff]
    %v53 = vpack.c.bf16 %v52, %v51
    %v54 = vld [vmem:[#allocation2] sm:$0xff]
    %v55 = vld [vmem:[#allocation2 + $0x8] sm:$0xff]
    %v56 = vld [vmem:[#allocation6] sm:$0xf]
    %v57 = vld [vmem:[#allocation6 + $0x4] sm:$0xf]
    %v58 = vld [vmem:[#allocation6 + $0x8] sm:$0xf]
    %v59 = vld [vmem:[#allocation6 + $0xc] sm:$0xf]
    %v64 = vunpack.c.l.b16 %v56
    %v65 = vunpack.c.l.b16 %v57
    %v66 = vunpack.c.l.b16 %v58
    %v67 = vunpack.c.l.b16 %v59
    %v68 = vpack.c.b16 %v65, %v64
    %v69 = vpack.c.b16 %v67, %v66
    %vm72 = vcmask 261120
    %v74 = vsel %vm72, %v53, 0
    %76 = vmatprep.subr.bf16.mxu0 0
    %77 = vmatpush1.bf16.msra.mxu0 %v68
    %78 = vmatprep.subr.bf16.mxu0 0
    %79 = vmatpush1.bf16.msra.mxu0 %v69
    %80 = vmatprep.subr.bf16.mxu0 0
    %81 = vmatpush1.bf16.msra.mxu0 0
    %82 = vmatprep.subr.bf16.mxu0 0
    %83 = vmatpush1.bf16.msra.mxu0 0
    %84 = vmatprep.subr.bf16.mxu0 0
    %85 = vmatpush1.bf16.msra.mxu0 0
    %86 = vmatprep.subr.bf16.mxu0 0
    %87 = vmatpush1.bf16.msra.mxu0 0
    %88 = vmatprep.subr.bf16.mxu0 0
    %89 = vmatpush1.bf16.msra.mxu0 0
    %90 = vmatprep.subr.bf16.mxu0 0
    %91 = vmatpush1.bf16.msra.mxu0 0
    %92 = vmatprep.subr.bf16.mxu0 0
    %93 = vmatpush1.bf16.msra.mxu0 0
    %94 = vmatprep.subr.bf16.mxu0 0
    %95 = vmatpush1.bf16.msra.mxu0 0
    %96 = vmatprep.subr.bf16.mxu0 0
    %97 = vmatpush1.bf16.msra.mxu0 0
    %98 = vmatprep.subr.bf16.mxu0 0
    %99 = vmatpush1.bf16.msra.mxu0 0
    %100 = vmatprep.subr.bf16.mxu0 0
    %101 = vmatpush1.bf16.msra.mxu0 0
    %102 = vmatprep.subr.bf16.mxu0 0
    %103 = vmatpush1.bf16.msra.mxu0 0
    %104 = vmatprep.subr.bf16.mxu0 0
    %105 = vmatpush1.bf16.msra.mxu0 0
    %106 = vmatprep.subr.bf16.mxu0 0
    %107 = vmatpush1.bf16.msra.mxu0 0
    %108 = vmatprep.mubr.bf16.mxu0 0
    %109 = vmatmul.mubr.bf16.gmra.mrb[0].mxu0 %v74
    %v110 = vpop.f32.mrb[0].mxu0
    %v111 = vadd.f32 0.0, %v110
    %v112 = vpop.f32.mrb[0].mxu0
    %v113 = vpop.f32.mrb[0].mxu0
    %v114 = vadd.f32 0.0, %v113
    %v115 = vpop.f32.mrb[0].mxu0
    %116 = vdwg.mxu0
    %v117 = vadd.f32 %v54, %v111
    %v118 = vadd.f32 %v55, %v114
    %119 = vst.msk [vmem:[#allocation2] sm:$0xff] %vm72, %v117
    %120 = vst.msk [vmem:[#allocation2 + $0x8] sm:$0xff] %vm72, %v118
    // Predicated region
    $region26: #{tpu_custom_call.1} parent=1 // pred_check
      %p121 = pneg %p44
    $region27: #{tpu_custom_call.1} parent=1 // pred_check_branch
      %123 = sbr.rel (%p121) target = $region29
    $region28: #{tpu_custom_call.1} parent=1 // pred_region
      %v124 = vld [vmem:[#allocation2] sm:$0xff]
      %v125 = vld [vmem:[#allocation2 + $0x8] sm:$0xff]
      %v126 = vld [vmem:[%s2] sm:$0x1]
      %v128 = vlaneseq
      %v129 = vshrl.u32 %v128, 7
      %v130 = vsub.s32 0, %v129
      %v131 = vrot.slane %v126, %v130
      %v133 = vadd.f32 %v124, %v131
      %v134 = vadd.f32 %v125, %v131
      %v135 = vpack.c.bf16 %v134, %v133
      %v137 = vunpack.c.l.b16 %v135
      %v138 = vunpack.c.h.b16 %v135
      %v139 = vpack.c.b16 %v137, %v137
      %v140 = vpack.c.b16 %v138, %v138
      %vm143 = vcmask 257024
      %144 = vst.msk [vmem:[#allocation8] sm:$0xf] %vm143, %v139
      %145 = vst.msk [vmem:[#allocation8 + $0x4] sm:$0xf] %vm143, %v140
    $region29: #{tpu_custom_call.1} parent=1 // pred_fallthru
      _
    // Predicated region
    $region30: #{tpu_custom_call.1} parent=1 // pred_check
      _
    $region31: #{tpu_custom_call.1} parent=1 // pred_check_branch
      %147 = sbr.rel (0) target = $region33
    $region32: #{tpu_custom_call.1} parent=1 // pred_region
      %s149 = ssub.s32 128, 128
      %150 = vsyncadd [#allocation5], %s149
      %s151 = sshll.u32 [#allocation8], 4
      %s152 = int_to_ptr.vmem [resolvable:$true] %s151
      %157 = dma.vmem_to_hbm [thread:$0]  %s152, 128, %s3, [#allocation5], 64, 64, 4
    $region33: #{tpu_custom_call.1} parent=1 // pred_fallthru
      _
    // Predicated region
    $region34: #{tpu_custom_call.1} parent=1 // pred_check
      _
    $region35: #{tpu_custom_call.1} parent=1 // pred_check_branch
      %159 = sbr.rel (0) target = $region37
    $region36: #{tpu_custom_call.1} parent=1 // pred_region
      %160 = dma.done [#allocation5], 128
    $region37: #{tpu_custom_call.1} parent=1 // pred_fallthru
      _
    %161 = vsyncpa [#allocation4], 1
    %162 = vsyncpa [#allocation7], 1
    %163 = vsyncpa [#allocation5], 1

</llo_original>
